<compile_context>
chip_gen: v7x
topology: tpu7x:2x2x1
jax: 0.10.0
libtpu: 0.0.40
codegen_flags: <defaults>
</compile_context>

<pallas_src>
import functools

import jax
import jax.numpy as jnp
from jax.experimental import pallas as pl
from jax.experimental.pallas import tpu as pltpu


def _rbf_toeplitz_kernel(x_ref, g_ref, ones_ref, wsq_ref, o_ref, *,
                         kh, stride, nb, ho, wo, c_out):
    """One block of NB packed images per grid step.

    x_ref   : (NB, Hp, Wp*C_in)          packed, spatially padded images
    g_ref   : (kH, Wp*C_in, Wo*C_out)    -2 * shifted-window conv weights (resident)
    ones_ref: (Wp*C_in, Wo*C_out)        shifted-window ones (x^2 window sums)
    wsq_ref : (1, Wo*C_out)              ||w_o||^2 + 1e-8, tiled lane-dense (f32)
    o_ref   : (NB, Ho, Wo*C_out)         lane-dense output block
    """
    x = x_ref[...]                                   # (NB, Hp, Wp*C_in)
    wpc = x.shape[-1]
    nrows = nb * ho
    h_span = (ho - 1) * stride + 1

    sq = x * x                                       # squared ONCE (hoisted)

    acc = None                                       # f32 (nrows, Wo*C_out)
    sq_rows = None                                   # sum over kernel rows of x^2 slabs
    for i in range(kh):
        # Pure sublane slice + leading-dim merge: no lane relayout, feeds the
        # MXU in native dtype; accumulate in f32.
        rows = x[:, i:i + h_span:stride, :].reshape(nrows, wpc)
        term = jnp.dot(rows, g_ref[i], preferred_element_type=jnp.float32)
        acc = term if acc is None else acc + term
        srows = sq[:, i:i + h_span:stride, :].reshape(nrows, wpc)
        sq_rows = srows if sq_rows is None else sq_rows + srows

    # x^2 window sums (replicated across C_out) via a single extra MXU matmul.
    acc = acc + jnp.dot(sq_rows, ones_ref[...], preferred_element_type=jnp.float32)

    dist_sq = acc + wsq_ref[...]                     # = w_sq - 2*dot + x_sq + 1e-8
    out = jnp.exp(dist_sq * (-1.0 / 16.0))
    o_ref[...] = out.reshape(nb, ho, wo * c_out).astype(o_ref.dtype)


def rbf_conv2d(x, weight, bias=None, stride=1, padding=1):
    """Forward pass of RBFConv2d.  `bias` is a module parameter but cancels
    exactly (conv(x)+b-b), so it is accepted and unused."""
    del bias
    N, C_in, H, W = x.shape
    C_out, _, kH, kW = weight.shape
    Hp, Wp = H + 2 * padding, W + 2 * padding
    Ho = (Hp - kH) // stride + 1
    Wo = (Wp - kW) // stride + 1

    cdt = jnp.promote_types(x.dtype, weight.dtype)   # native MXU operand dtype

    # ---- packed input: (N, Hp, Wp*C_in); lane dim = Wp*C_in (dense) ----
    xp = jnp.pad(x, ((0, 0), (0, 0), (padding, padding), (padding, padding)))
    xp = xp.transpose(0, 2, 3, 1).reshape(N, Hp, Wp * C_in).astype(cdt)

    # ---- shifted-window (Toeplitz) RHS matrices, built once in the wrapper ----
    # column index = w*C_out + o ; row index (per kernel row i) = w'*C_in + c
    jmat = jnp.arange(Wp)[:, None] - stride * jnp.arange(Wo)[None, :]   # w' - s*w
    valid = (jmat >= 0) & (jmat < kW)                                   # (Wp, Wo)
    jcl = jnp.clip(jmat, 0, kW - 1)
    w_t = jnp.transpose(weight, (2, 1, 3, 0)).astype(cdt)               # (kH,Cin,kW,Cout)
    g = jnp.take(w_t, jcl, axis=2)                                      # (kH,Cin,Wp,Wo,Cout)
    g = g * valid[None, None, :, :, None].astype(cdt)
    g = (-2.0) * jnp.transpose(g, (0, 2, 1, 3, 4))                      # (kH,Wp,Cin,Wo,Cout)
    g = g.reshape(kH, Wp * C_in, Wo * C_out)                            # -2 folded in
    ones_rhs = jnp.broadcast_to(valid[:, None, :, None],
                                (Wp, C_in, Wo, C_out)).astype(cdt)
    ones_rhs = ones_rhs.reshape(Wp * C_in, Wo * C_out)

    # Squared filter norms (+eps), tiled lane-dense to (1, Wo*C_out), f32.
    w_sq = jnp.sum(weight.astype(jnp.float32) ** 2, axis=(1, 2, 3))     # (C_out,)
    wsq_dense = jnp.tile(w_sq + 1e-8, Wo).reshape(1, Wo * C_out)

    # ---- VMEM budget (generation aware) and NB image blocking ----
    def rup(v, m):
        return -(-v // m) * m

    cbytes = jnp.dtype(cdt).itemsize
    obytes = jnp.dtype(x.dtype).itemsize
    in_img = rup(Hp, 8) * rup(Wp * C_in, 128) * cbytes
    out_img = rup(Ho, 8) * rup(Wo * C_out, 128) * obytes
    f32_img = rup(Hp, 8) * rup(Wp * C_in, 128) * 4
    f32_out = rup(Ho, 8) * rup(Wo * C_out, 128) * 4
    # double-buffered I/O blocks + live temporaries (x, sq, row slabs, sq_rows,
    # acc, dist, exp) -- deliberately generous so the declared limit isn't undercut.
    per_image = 2 * in_img + 2 * out_img + 4 * f32_img + 4 * f32_out
    rhs_bytes = (kH + 1) * rup(Wp * C_in, 8) * rup(Wo * C_out, 128) * cbytes
    const_bytes = rhs_bytes + 8 * 128 * 4 + (4 << 20)   # + wsq + Mosaic scratch margin

    try:  # physical VMEM: 128 MiB on v5e/v6e, 64 MiB per TC on v7x
        phys = getattr(pltpu.get_tpu_info(), "vmem_capacity_bytes", None) or (64 << 20)
    except Exception:
        phys = 64 << 20
    vmem_cap = int(phys * 0.8)          # ~51 MiB (v7x) / ~102 MiB (v5e/v6e) headroom

    nb = 1
    target_steps = min(N, 8)            # keep the grid long enough to pipeline
    for cand in range(1, N + 1):
        if N % cand:
            continue
        if N // cand < target_steps:
            break
        if const_bytes + cand * per_image <= vmem_cap:
            nb = cand

    kernel = functools.partial(_rbf_toeplitz_kernel, kh=kH, stride=stride,
                               nb=nb, ho=Ho, wo=Wo, c_out=C_out)

    out_packed = pl.pallas_call(
        kernel,
        out_shape=jax.ShapeDtypeStruct((N, Ho, Wo * C_out), x.dtype),
        grid_spec=pltpu.PrefetchScalarGridSpec(
            num_scalar_prefetch=0,
            grid=(N // nb,),
            in_specs=[
                pl.BlockSpec((nb, Hp, Wp * C_in), lambda n: (n, 0, 0)),
                # Constant index maps: RHS tensors stay VMEM-resident.
                pl.BlockSpec((kH, Wp * C_in, Wo * C_out), lambda n: (0, 0, 0)),
                pl.BlockSpec((Wp * C_in, Wo * C_out), lambda n: (0, 0)),
                pl.BlockSpec((1, Wo * C_out), lambda n: (0, 0)),
            ],
            out_specs=pl.BlockSpec((nb, Ho, Wo * C_out), lambda n: (n, 0, 0)),
        ),
        compiler_params=pltpu.CompilerParams(
            dimension_semantics=("parallel",),
            vmem_limit_bytes=int(vmem_cap)),
    )(xp, g, ones_rhs, wsq_dense)

    # TODO(synk): for very large feature maps / channel counts (per-image block
    # exceeding the VMEM budget, esp. v7x 64 MiB), add an output-row-band grid
    # axis with a (kH-1)-row halo in the input index_map, and switch to the
    # classic K=C_in*kH*kW im2col matmul when C_in/C_out are large.
    return out_packed.reshape(N, Ho, Wo, C_out).transpose(0, 3, 1, 2)


def rbf_conv2d_ref(x, weight, bias, stride=1, padding=1):
    """Plain-JAX mirror of the PyTorch forward (bias added then subtracted,
    exactly as in the module, to verify the cancellation assumption)."""
    dn = jax.lax.conv_dimension_numbers(
        x.shape, weight.shape, ('NCHW', 'OIHW', 'NCHW'))
    pads = [(padding, padding), (padding, padding)]
    conv = jax.lax.conv_general_dilated(
        x, weight, (stride, stride), pads, dimension_numbers=dn)
    b = bias.reshape(1, -1, 1, 1)
    dot = (conv + b) - b
    w_sq = jnp.sum(weight ** 2, axis=(1, 2, 3)).reshape(1, -1, 1, 1)
    ones_w = jnp.ones((1,) + weight.shape[1:], x.dtype)
    x_sq = jax.lax.conv_general_dilated(
        x ** 2, ones_w, (stride, stride), pads, dimension_numbers=dn)
    dist_sq = w_sq - 2.0 * dot + x_sq + 1e-8
    return jnp.exp(-dist_sq / 16.0)


if __name__ == "__main__":
    key = jax.random.PRNGKey(0)
    kx, kw_, kb = jax.random.split(key, 3)

    # Conv2d(in_channels=4, out_channels=8, kernel_size=3, stride=1, padding=1)
    N, C_in, H, W = 2, 4, 16, 16
    C_out, kH, kW = 8, 3, 3
    stride, padding = 1, 1

    x = jax.random.normal(kx, (N, C_in, H, W), jnp.float32)

    # Deterministic Conv2d-style init (uniform in +/- 1/sqrt(fan_in)).
    fan_in = C_in * kH * kW
    bound = 1.0 / (fan_in ** 0.5)
    weight = jax.random.uniform(kw_, (C_out, C_in, kH, kW), jnp.float32,
                                -bound, bound)
    bias = jax.random.uniform(kb, (C_out,), jnp.float32, -bound, bound)

    out = jax.block_until_ready(rbf_conv2d(x, weight, bias, stride, padding))
    ref = rbf_conv2d_ref(x, weight, bias, stride, padding)

    assert out.shape == (N, C_out, H, W), out.shape
    max_err = float(jnp.max(jnp.abs(out - ref)))
    assert jnp.allclose(out, ref, atol=1e-4, rtol=1e-4), max_err
    print("KERNEL_OK")
</pallas_src>

<mosaic_0001>
module attributes {stable_mosaic.version = 11 : i64} {
  func.func @_rbf_toeplitz_kernel(%arg0: i32, %arg1: memref<1x18x72xf32, #tpu.memory_space<vmem>>, %arg2: memref<3x72x128xf32, #tpu.memory_space<vmem>>, %arg3: memref<72x128xf32, #tpu.memory_space<vmem>>, %arg4: memref<1x128xf32, #tpu.memory_space<vmem>>, %arg5: memref<1x16x128xf32, #tpu.memory_space<vmem>>) attributes {dimension_semantics = [#tpu.dimension_semantics<parallel>], iteration_bounds = array<i64: 2>, scalar_prefetch = 0 : i64, scratch_operands = 0 : i64, tpu.core_type = #tpu.core_type<tc>, window_params = [{transform_indices = @transform_0, window_bounds = array<i64: 1, 18, 72>}, {pipeline_mode = #tpu.pipeline_mode<synchronous>, transform_indices = @transform_1, window_bounds = array<i64: 3, 72, 128>}, {pipeline_mode = #tpu.pipeline_mode<synchronous>, transform_indices = @transform_2, window_bounds = array<i64: 72, 128>}, {pipeline_mode = #tpu.pipeline_mode<synchronous>, transform_indices = @transform_3, window_bounds = array<i64: 1, 128>}, {transform_indices = @transform_4, window_bounds = array<i64: 1, 16, 128>}]} {
    %c0 = arith.constant 0 : index
    %c0_0 = arith.constant 0 : index
    %c0_1 = arith.constant 0 : index
    %0 = vector.load %arg1[%c0, %c0_0, %c0_1] : memref<1x18x72xf32, #tpu.memory_space<vmem>>, vector<1x18x72xf32>
    %1 = arith.mulf %0, %0 : vector<1x18x72xf32>
    %2 = vector.extract_strided_slice %0 {offsets = [0, 0, 0], sizes = [1, 16, 72], strides = [1, 1, 1]} : vector<1x18x72xf32> to vector<1x16x72xf32>
    %3 = vector.shape_cast %2 : vector<1x16x72xf32> to vector<16x72xf32>
    %c0_2 = arith.constant 0 : index
    %c0_3 = arith.constant 0 : index
    %c0_4 = arith.constant 0 : index
    %4 = vector.load %arg2[%c0_2, %c0_3, %c0_4] : memref<3x72x128xf32, #tpu.memory_space<vmem>>, vector<1x72x128xf32>
    %5 = vector.shape_cast %4 : vector<1x72x128xf32> to vector<72x128xf32>
    %cst = arith.constant dense<0.000000e+00> : vector<16x128xf32>
    %6 = tpu.matmul %3, %5, %cst {dimension_numbers = #tpu.dot_dimension_numbers<[1], [0], [0], [1], [0, 0, 1, 1], [], []>} : vector<16x72xf32>, vector<72x128xf32>, vector<16x128xf32> -> vector<16x128xf32>
    %7 = vector.extract_strided_slice %1 {offsets = [0, 0, 0], sizes = [1, 16, 72], strides = [1, 1, 1]} : vector<1x18x72xf32> to vector<1x16x72xf32>
    %8 = vector.shape_cast %7 : vector<1x16x72xf32> to vector<16x72xf32>
    %9 = vector.extract_strided_slice %0 {offsets = [0, 1, 0], sizes = [1, 16, 72], strides = [1, 1, 1]} : vector<1x18x72xf32> to vector<1x16x72xf32>
    %10 = vector.shape_cast %9 : vector<1x16x72xf32> to vector<16x72xf32>
    %c1 = arith.constant 1 : index
    %c0_5 = arith.constant 0 : index
    %c0_6 = arith.constant 0 : index
    %11 = vector.load %arg2[%c1, %c0_5, %c0_6] : memref<3x72x128xf32, #tpu.memory_space<vmem>>, vector<1x72x128xf32>
    %12 = vector.shape_cast %11 : vector<1x72x128xf32> to vector<72x128xf32>
    %cst_7 = arith.constant dense<0.000000e+00> : vector<16x128xf32>
    %13 = tpu.matmul %10, %12, %cst_7 {dimension_numbers = #tpu.dot_dimension_numbers<[1], [0], [0], [1], [0, 0, 1, 1], [], []>} : vector<16x72xf32>, vector<72x128xf32>, vector<16x128xf32> -> vector<16x128xf32>
    %14 = arith.addf %6, %13 : vector<16x128xf32>
    %15 = vector.extract_strided_slice %1 {offsets = [0, 1, 0], sizes = [1, 16, 72], strides = [1, 1, 1]} : vector<1x18x72xf32> to vector<1x16x72xf32>
    %16 = vector.shape_cast %15 : vector<1x16x72xf32> to vector<16x72xf32>
    %17 = arith.addf %8, %16 : vector<16x72xf32>
    %18 = vector.extract_strided_slice %0 {offsets = [0, 2, 0], sizes = [1, 16, 72], strides = [1, 1, 1]} : vector<1x18x72xf32> to vector<1x16x72xf32>
    %19 = vector.shape_cast %18 : vector<1x16x72xf32> to vector<16x72xf32>
    %c2 = arith.constant 2 : index
    %c0_8 = arith.constant 0 : index
    %c0_9 = arith.constant 0 : index
    %20 = vector.load %arg2[%c2, %c0_8, %c0_9] : memref<3x72x128xf32, #tpu.memory_space<vmem>>, vector<1x72x128xf32>
    %21 = vector.shape_cast %20 : vector<1x72x128xf32> to vector<72x128xf32>
    %cst_10 = arith.constant dense<0.000000e+00> : vector<16x128xf32>
    %22 = tpu.matmul %19, %21, %cst_10 {dimension_numbers = #tpu.dot_dimension_numbers<[1], [0], [0], [1], [0, 0, 1, 1], [], []>} : vector<16x72xf32>, vector<72x128xf32>, vector<16x128xf32> -> vector<16x128xf32>
    %23 = arith.addf %14, %22 : vector<16x128xf32>
    %24 = vector.extract_strided_slice %1 {offsets = [0, 2, 0], sizes = [1, 16, 72], strides = [1, 1, 1]} : vector<1x18x72xf32> to vector<1x16x72xf32>
    %25 = vector.shape_cast %24 : vector<1x16x72xf32> to vector<16x72xf32>
    %26 = arith.addf %17, %25 : vector<16x72xf32>
    %c0_11 = arith.constant 0 : index
    %c0_12 = arith.constant 0 : index
    %27 = vector.load %arg3[%c0_11, %c0_12] : memref<72x128xf32, #tpu.memory_space<vmem>>, vector<72x128xf32>
    %cst_13 = arith.constant dense<0.000000e+00> : vector<16x128xf32>
    %28 = tpu.matmul %26, %27, %cst_13 {dimension_numbers = #tpu.dot_dimension_numbers<[1], [0], [0], [1], [0, 0, 1, 1], [], []>} : vector<16x72xf32>, vector<72x128xf32>, vector<16x128xf32> -> vector<16x128xf32>
    %29 = arith.addf %23, %28 : vector<16x128xf32>
    %c0_14 = arith.constant 0 : index
    %c0_15 = arith.constant 0 : index
    %30 = vector.load %arg4[%c0_14, %c0_15] : memref<1x128xf32, #tpu.memory_space<vmem>>, vector<1x128xf32>
    %31 = vector.broadcast %30 : vector<1x128xf32> to vector<16x128xf32>
    %32 = arith.addf %29, %31 : vector<16x128xf32>
    %cst_16 = arith.constant -6.250000e-02 : f32
    %33 = vector.broadcast %cst_16 : f32 to vector<16x128xf32>
    %34 = arith.mulf %32, %33 : vector<16x128xf32>
    %35 = math.exp %34 : vector<16x128xf32>
    %36 = vector.shape_cast %35 : vector<16x128xf32> to vector<1x16x128xf32>
    %c0_17 = arith.constant 0 : index
    %c0_18 = arith.constant 0 : index
    %c0_19 = arith.constant 0 : index
    %37 = vector.load %arg5[%c0_17, %c0_18, %c0_19] : memref<1x16x128xf32, #tpu.memory_space<vmem>>, vector<1x16x128xf32>
    tpu.vector_store %arg5[%c0_17, %c0_18, %c0_19], %36 {strides = array<i32>} : memref<1x16x128xf32, #tpu.memory_space<vmem>>, vector<1x16x128xf32>,
    return
  }
  func.func @transform_0(%arg0: i32) -> (i32, i32, i32) {
    %c0_i32 = arith.constant 0 : i32
    %c0_i32_0 = arith.constant 0 : i32
    %c0_i32_1 = arith.constant 0 : i32
    return %arg0, %c0_i32, %c0_i32_0 : i32, i32, i32
  }
  func.func @transform_1(%arg0: i32) -> (i32, i32, i32) {
    %c0_i32 = arith.constant 0 : i32
    %c0_i32_0 = arith.constant 0 : i32
    %c0_i32_1 = arith.constant 0 : i32
    %c0_i32_2 = arith.constant 0 : i32
    return %c0_i32, %c0_i32_0, %c0_i32_1 : i32, i32, i32
  }
  func.func @transform_2(%arg0: i32) -> (i32, i32) {
    %c0_i32 = arith.constant 0 : i32
    %c0_i32_0 = arith.constant 0 : i32
    %c0_i32_1 = arith.constant 0 : i32
    return %c0_i32, %c0_i32_0 : i32, i32
  }
  func.func @transform_3(%arg0: i32) -> (i32, i32) {
    %c0_i32 = arith.constant 0 : i32
    %c0_i32_0 = arith.constant 0 : i32
    %c0_i32_1 = arith.constant 0 : i32
    return %c0_i32, %c0_i32_0 : i32, i32
  }
  func.func @transform_4(%arg0: i32) -> (i32, i32, i32) {
    %c0_i32 = arith.constant 0 : i32
    %c0_i32_0 = arith.constant 0 : i32
    %c0_i32_1 = arith.constant 0 : i32
    return %arg0, %c0_i32, %c0_i32_0 : i32, i32, i32
  }
}

</mosaic_0001>

<llo_original>
// kernel: tpu_custom_call.1
$region0: #{tpu_custom_call.1}
  #allocation0 [shape = 'u32[]', space=smem, size = 0x4, offset = 0x4, fixed_abs, tag = 'smem constant byte address 0x4 - core index']
  #allocation1 [shape = 'u32[144,128]{1,0:T(1,128)}', space=vmem, size = 0x12000, scoped, tag = 'internal scratch']
  %s0 = inlined_call_operand.vmem [shape: f32[2,18,72], index: 0, kind: input, shape index: {}]
  %s1 = inlined_call_operand.hbm [shape: f32[3,72,128], index: 1, kind: input, shape index: {}]
  %s2 = inlined_call_operand.vmem [shape: f32[72,128], index: 2, kind: input, shape index: {}]
  %s3 = inlined_call_operand.vmem [shape: f32[1,128], index: 3, kind: input, shape index: {}]
  %s4 = inlined_call_operand.hbm [shape: f32[2,16,128], index: 4, kind: output, shape index: {}]
  %s5 = sld [smem:[#allocation0]]
  $region53: #{tpu_custom_call.1} parent=0
    _
  %s7 = ssub.s32 1, %s5
  %s8 = scalar_select 0, %s7, %s5
  $region1: #{tpu_custom_call.1} parent=0
    #allocation2 [shape = 'u8[110592]{0}', space=vmem, size = 0x1b000, scoped, tag = 'input window, operand 1, single buffered']
    #allocation3 [shape = 's32[2]{0}', space=sflag, size = 0x8, scoped, tag = 'scoped memory for tpu_custom_call.1']
    #allocation4 [shape = 's32[2]{0}', space=sflag, size = 0x8, scoped, tag = 'scoped memory for tpu_custom_call.1']
    #allocation5 [shape = 'u8[16384]{0}', space=vmem, size = 0x4000, scoped, tag = 'output window, operand 0']
    %9 = vsyncpa [#allocation3], 0
    %10 = vsyncpa [#allocation4], 0
    %s11 = scalar_lea.sflag [#allocation4], 1
    %12 = vsyncpa %s11, 0
    loop: start=0, step=1, limit=4
    $region2: #{tpu_custom_call.1} parent=1 // loop_pre_header
      _
    $region3: #{tpu_custom_call.1} parent=1 // loop_header
      %s14 = sphi 0, %s18
      %p15 = scmp.ge.s32.totalorder %s14, 4
      %s24 = sphi 0, %s26
      %s27 = sphi 0, %s24
      %s28 = sphi 0, %s27
      %s44 = sphi 0, %s28
      %s48 = sphi 0, %s48
      %s50 = sphi 0, %s48
      %s51 = sphi 0, %s50
      %s65 = sphi 0, %s51
      %s69 = sphi 0, %s69
      %s71 = sphi 0, %s69
      %s72 = sphi 0, %s71
      %s86 = sphi 0, %s72
      %s90 = sphi 0, %s90
      %s92 = sphi 0, %s90
      %s93 = sphi 0, %s92
      %s107 = sphi 0, %s93
      %s113 = sphi 0, %s115
      %s116 = sphi 0, %s113
      %s117 = sphi 0, %s116
      %s133 = sphi 0, %s117
    $region4: #{tpu_custom_call.1} parent=1 // loop_header_branch
      %17 = sbr.rel (%p15) target = $region8
    $region5: #{tpu_custom_call.1} parent=1 // loop_body
      %s19 = ssub.s32 %s14, 1
      %s20 = ssub.s32 %s14, 2
      %s21 = sadd.s32 %s14, 1
      %s22 = ssub.s32 %s14, %s21
      %p23 = scmp.eq.s32.totalorder %s22, 0
      %s25 = sadd.s32 %s24, 1
      %s26 = scalar_select %p23, %s24, %s25
      %p29 = pneg %p23
      %p30 = scmp.eq.s32.totalorder %s14, 1
      %p31 = por %p29, %p30
      %p32 = scmp.ne.s32.totalorder %s24, %s27
      %p33 = scmp.eq.s32.totalorder %s14, 0
      %p34 = por %p32, %p33
      %p35 = scmp.ne.s32.totalorder %s24, %s27
      %p36 = scmp.eq.s32.totalorder %s19, 1
      %p37 = por %p35, %p36
      %p38 = scmp.ne.s32.totalorder %s27, %s28
      %p39 = scmp.eq.s32.totalorder %s19, 0
      %p40 = por %p38, %p39
      %p41 = scmp.ne.s32.totalorder %s27, %s28
      %p42 = scmp.eq.s32.totalorder %s20, 1
      %p43 = por %p41, %p42
      %p45 = scmp.ne.s32.totalorder %s28, %s44
      %p46 = scmp.eq.s32.totalorder %s20, 0
      %p47 = por %p45, %p46
      %s49 = sadd.s32 %s48, 1
      %p52 = scmp.eq.s32.totalorder %s14, 1
      %p53 = scmp.ne.s32.totalorder %s48, %s50
      %p54 = scmp.eq.s32.totalorder %s14, 0
      %p55 = por %p53, %p54
      %p56 = scmp.ne.s32.totalorder %s48, %s50
      %p57 = scmp.eq.s32.totalorder %s19, 1
      %p58 = por %p56, %p57
      %p59 = scmp.ne.s32.totalorder %s50, %s51
      %p60 = scmp.eq.s32.totalorder %s19, 0
      %p61 = por %p59, %p60
      %p62 = scmp.ne.s32.totalorder %s50, %s51
      %p63 = scmp.eq.s32.totalorder %s20, 1
      %p64 = por %p62, %p63
      %p66 = scmp.ne.s32.totalorder %s51, %s65
      %p67 = scmp.eq.s32.totalorder %s20, 0
      %p68 = por %p66, %p67
      %s70 = sadd.s32 %s69, 1
      %p73 = scmp.eq.s32.totalorder %s14, 1
      %p74 = scmp.ne.s32.totalorder %s69, %s71
      %p75 = scmp.eq.s32.totalorder %s14, 0
      %p76 = por %p74, %p75
      %p77 = scmp.ne.s32.totalorder %s69, %s71
      %p78 = scmp.eq.s32.totalorder %s19, 1
      %p79 = por %p77, %p78
      %p80 = scmp.ne.s32.totalorder %s71, %s72
      %p81 = scmp.eq.s32.totalorder %s19, 0
      %p82 = por %p80, %p81
      %p83 = scmp.ne.s32.totalorder %s71, %s72
      %p84 = scmp.eq.s32.totalorder %s20, 1
      %p85 = por %p83, %p84
      %p87 = scmp.ne.s32.totalorder %s72, %s86
      %p88 = scmp.eq.s32.totalorder %s20, 0
      %p89 = por %p87, %p88
      %s91 = sadd.s32 %s90, 1
      %p94 = scmp.eq.s32.totalorder %s14, 1
      %p95 = scmp.ne.s32.totalorder %s90, %s92
      %p96 = scmp.eq.s32.totalorder %s14, 0
      %p97 = por %p95, %p96
      %p98 = scmp.ne.s32.totalorder %s90, %s92
      %p99 = scmp.eq.s32.totalorder %s19, 1
      %p100 = por %p98, %p99
      %p101 = scmp.ne.s32.totalorder %s92, %s93
      %p102 = scmp.eq.s32.totalorder %s19, 0
      %p103 = por %p101, %p102
      %p104 = scmp.ne.s32.totalorder %s92, %s93
      %p105 = scmp.eq.s32.totalorder %s20, 1
      %p106 = por %p104, %p105
      %p108 = scmp.ne.s32.totalorder %s93, %s107
      %p109 = scmp.eq.s32.totalorder %s20, 0
      %p110 = por %p108, %p109
      %s111 = ssub.s32 %s14, %s21
      %p112 = scmp.eq.s32.totalorder %s111, 0
      %s114 = sadd.s32 %s113, 1
      %s115 = scalar_select %p112, %s113, %s114
      %p118 = pneg %p112
      %p119 = scmp.eq.s32.totalorder %s14, 1
      %p120 = por %p118, %p119
      %p121 = scmp.ne.s32.totalorder %s113, %s116
      %p122 = scmp.eq.s32.totalorder %s14, 0
      %p123 = por %p121, %p122
      %p124 = scmp.ne.s32.totalorder %s113, %s116
      %p125 = scmp.eq.s32.totalorder %s19, 1
      %p126 = por %p124, %p125
      %p127 = scmp.ne.s32.totalorder %s116, %s117
      %p128 = scmp.eq.s32.totalorder %s19, 0
      %p129 = por %p127, %p128
      %p130 = scmp.ne.s32.totalorder %s116, %s117
      %p131 = scmp.eq.s32.totalorder %s20, 1
      %p132 = por %p130, %p131
      %p134 = scmp.ne.s32.totalorder %s117, %s133
      %p135 = scmp.eq.s32.totalorder %s20, 0
      %p136 = por %p134, %p135
      %p137 = scmp.le.s32.totalorder 1, %s14
      %p138 = scmp.lt.s32.totalorder %s14, 3
      %p139 = pnand %p137, %p138
      %p140 = pneg %p139
      // Predicated region
      $region9: #{tpu_custom_call.1} parent=5 // pred_check
        _
      $region10: #{tpu_custom_call.1} parent=5 // pred_check_branch
        %142 = sbr.rel (%p139) target = $region12
      $region11: #{tpu_custom_call.1} parent=5 // pred_region
        %s143 = ssub.s32 %s14, 1
        // Predicated region
        $region13: #{tpu_custom_call.1} parent=11 // pred_check
          %p144 = pneg %p61
        $region14: #{tpu_custom_call.1} parent=11 // pred_check_branch
          %146 = sbr.rel (%p144) target = $region16
        $region15: #{tpu_custom_call.1} parent=11 // pred_region
          %s148 = ssub.s32 3456, 3456
          %149 = vsyncadd [#allocation3], %s148
          %s150 = sshll.u32 [#allocation2], 4
          %s151 = int_to_ptr.vmem [resolvable:$true] %s150
          %156 = dma.hbm_to_vmem [thread:$0]  %s1, 3456, %s151, [#allocation3], 128, 128, 8
        $region16: #{tpu_custom_call.1} parent=11 // pred_fallthru
          _
        // Predicated region
        $region17: #{tpu_custom_call.1} parent=11 // pred_check
          %p157 = pneg %p82
        $region18: #{tpu_custom_call.1} parent=11 // pred_check_branch
          %159 = sbr.rel (%p157) target = $region20
        $region19: #{tpu_custom_call.1} parent=11 // pred_region
          _
        $region20: #{tpu_custom_call.1} parent=11 // pred_fallthru
          _
        // Predicated region
        $region21: #{tpu_custom_call.1} parent=11 // pred_check
          %p160 = pneg %p103
        $region22: #{tpu_custom_call.1} parent=11 // pred_check_branch
          %162 = sbr.rel (%p160) target = $region24
        $region23: #{tpu_custom_call.1} parent=11 // pred_region
          _
        $region24: #{tpu_custom_call.1} parent=11 // pred_fallthru
          _
      $region12: #{tpu_custom_call.1} parent=5 // pred_fallthru
        _
      %p163 = scmp.lt.s32.totalorder %s14, 2
      // Predicated region
      $region25: #{tpu_custom_call.1} parent=5 // pred_check
        %p164 = pneg %p163
      $region26: #{tpu_custom_call.1} parent=5 // pred_check_branch
        %166 = sbr.rel (%p164) target = $region28
      $region27: #{tpu_custom_call.1} parent=5 // pred_region
        // Predicated region
        $region29: #{tpu_custom_call.1} parent=27 // pred_check
          %p167 = pneg %p34
        $region30: #{tpu_custom_call.1} parent=27 // pred_check_branch
          %169 = sbr.rel (%p167) target = $region32
        $region31: #{tpu_custom_call.1} parent=27 // pred_region
          %p170 = scmp.lt.s32.totalorder %s14, 1
          %s171 = scalar_select %p170, %s14, 1
          %s172 = smul.addr %s171, 3
          %s173 = smul.addr %s172, 8
          %s174 = scalar_lea.vmem %s0, %s173
        $region32: #{tpu_custom_call.1} parent=27 // pred_fallthru
          _
      $region28: #{tpu_custom_call.1} parent=5 // pred_fallthru
        _
      %p175 = scmp.le.s32.totalorder 1, %s14
      %p176 = scmp.lt.s32.totalorder %s14, 3
      %p177 = pnand %p175, %p176
      %p178 = pneg %p177
      // Predicated region
      $region33: #{tpu_custom_call.1} parent=5 // pred_check
        _
      $region34: #{tpu_custom_call.1} parent=5 // pred_check_branch
        %180 = sbr.rel (%p177) target = $region36
      $region35: #{tpu_custom_call.1} parent=5 // pred_region
        %s181 = ssub.s32 %s14, 1
        // Predicated region
        $region37: #{tpu_custom_call.1} parent=35 // pred_check
          %p182 = pneg %p61
        $region38: #{tpu_custom_call.1} parent=35 // pred_check_branch
          %184 = sbr.rel (%p182) target = $region40
        $region39: #{tpu_custom_call.1} parent=35 // pred_region
          %185 = dma.done [#allocation3], 3456
        $region40: #{tpu_custom_call.1} parent=35 // pred_fallthru
          _
        %p186 = scmp.lt.s32.totalorder %s19, 1
        %s187 = scalar_select %p186, %s19, 1
        %s188 = smul.addr %s187, 3
        %s189 = smul.addr %s188, 8
        %s190 = scalar_lea.vmem %s0, %s189
        %p191 = pneg %p40
        %p192 = pneg %p37
        %p193 = pneg %p61
        %p194 = pneg %p58
        %p195 = pneg %p82
        %p196 = pneg %p79
        %p197 = pneg %p103
        %p198 = pneg %p100
        %p199 = pneg %p129
        %p200 = pneg %p126
        %s201 = sand.u32 %s116, 1
        %s202 = scalar_lea.sflag [#allocation4], %s201
        %s203 = sand.u32 %s116, 1
        %s204 = smul.addr %s203, 16
        %s205 = scalar_lea.vmem [#allocation5], %s204
        %p206 = scmp.lt.s32.totalorder %s19, 1
        %s207 = scalar_select %p206, %s19, 1
        %s208 = smul.addr %s207, 3
        %s209 = smul.addr %s208, 8
        %s210 = scalar_lea.vmem %s0, %s209
        %v211 = vld [vmem:[%s210] sm:$0xff]
        %v212 = vld [vmem:[%s210 + $0x8] sm:$0xff]
        %v213 = vld [vmem:[%s210 + $0x10] sm:$0x3]
        %v214 = vmul.f32 %v211, %v211
        %v215 = vmul.f32 %v212, %v212
        %v216 = vmul.f32 %v213, %v213
        %v217 = vld [vmem:[#allocation2] sm:$0xff]
        %v218 = vld [vmem:[#allocation2 + $0x8] sm:$0xff]
        %v219 = vld [vmem:[#allocation2 + $0x10] sm:$0xff]
        %v220 = vld [vmem:[#allocation2 + $0x18] sm:$0xff]
        %v221 = vld [vmem:[#allocation2 + $0x20] sm:$0xff]
        %v222 = vld [vmem:[#allocation2 + $0x28] sm:$0xff]
        %v223 = vld [vmem:[#allocation2 + $0x30] sm:$0xff]
        %v224 = vld [vmem:[#allocation2 + $0x38] sm:$0xff]
        %v225 = vld [vmem:[#allocation2 + $0x40] sm:$0xff]
        %s226 = scalar_lea.vmem [#allocation2], 72
        %v227 = vld [vmem:[%s226] sm:$0xff]
        %v228 = vld [vmem:[%s226 + $0x8] sm:$0xff]
        %v229 = vld [vmem:[%s226 + $0x10] sm:$0xff]
        %v230 = vld [vmem:[%s226 + $0x18] sm:$0xff]
        %v231 = vld [vmem:[%s226 + $0x20] sm:$0xff]
        %v232 = vld [vmem:[%s226 + $0x28] sm:$0xff]
        %v233 = vld [vmem:[%s226 + $0x30] sm:$0xff]
        %v234 = vld [vmem:[%s226 + $0x38] sm:$0xff]
        %v235 = vld [vmem:[%s226 + $0x40] sm:$0xff]
        %vm239 = vcmask 1046528
        %v240 = vrot.slane %v211, 1
        %v241 = vrot.slane %v212, 1
        %v242 = vsel %vm239, %v240, %v241
        %v243 = vrot.slane %v213, 1
        %v244 = vsel %vm239, %v241, %v243
        %vm245 = vcmask 588800
        %v246 = vsel %vm245, %v242, 0
        %v248 = vsel %vm245, %v244, 0
        %250 = vmatprep.subr.mxu0 0.0
        %251 = vmatpush1.msra.mxu0 %v227
        %252 = vmatprep.subr.mxu0 0.0
        %253 = vmatpush1.msra.mxu0 %v228
        %254 = vmatprep.subr.mxu0 0.0
        %255 = vmatpush1.msra.mxu0 %v229
        %256 = vmatprep.subr.mxu0 0.0
        %257 = vmatpush1.msra.mxu0 %v230
        %258 = vmatprep.subr.mxu0 0.0
        %259 = vmatpush1.msra.mxu0 %v231
        %260 = vmatprep.subr.mxu0 0.0
        %261 = vmatpush1.msra.mxu0 %v232
        %262 = vmatprep.subr.mxu0 0.0
        %263 = vmatpush1.msra.mxu0 %v233
        %264 = vmatprep.subr.mxu0 0.0
        %265 = vmatpush1.msra.mxu0 %v234
        %266 = vmatprep.subr.mxu0 0.0
        %267 = vmatpush1.msra.mxu0 %v235
        %268 = vmatprep.subr.mxu0 0.0
        %269 = vmatpush1.msra.mxu0 0.0
        %270 = vmatprep.subr.mxu0 0.0
        %271 = vmatpush1.msra.mxu0 0.0
        %272 = vmatprep.subr.mxu0 0.0
        %273 = vmatpush1.msra.mxu0 0.0
        %274 = vmatprep.subr.mxu0 0.0
        %275 = vmatpush1.msra.mxu0 0.0
        %276 = vmatprep.subr.mxu0 0.0
        %277 = vmatpush1.msra.mxu0 0.0
        %278 = vmatprep.subr.mxu0 0.0
        %279 = vmatpush1.msra.mxu0 0.0
        %280 = vmatprep.subr.mxu0 0.0
        %281 = vmatpush1.msra.mxu0 0.0
        %282 = vmatprep.subr.mxu0 0.0
        %283 = vmatpush1.msra.mxu0 0.0
        %284 = vmatprep.subr.mxu0 0.0
        %285 = vmatpush1.msra.mxu0 0.0
        %286 = vmatprep.subr.mxu0 0.0
        %287 = vmatpush1.msra.mxu0 0.0
        %288 = vmatprep.subr.mxu0 0.0
        %289 = vmatpush1.msra.mxu0 0.0
        %290 = vmatprep.subr.mxu0 0.0
        %291 = vmatpush1.msra.mxu0 0.0
        %292 = vmatprep.subr.mxu0 0.0
        %293 = vmatpush1.msra.mxu0 0.0
        %294 = vmatprep.subr.mxu0 0.0
        %295 = vmatpush1.msra.mxu0 0.0
        %296 = vmatprep.subr.mxu0 0.0
        %297 = vmatpush1.msra.mxu0 0.0
        %298 = vmatprep.subr.mxu0 0.0
        %299 = vmatpush1.msra.mxu0 0.0
        %300 = vmatprep.subr.mxu0 0.0
        %301 = vmatpush1.msra.mxu0 0.0
        %302 = vmatprep.subr.mxu0 0.0
        %303 = vmatpush1.msra.mxu0 0.0
        %304 = vmatprep.subr.mxu0 0.0
        %305 = vmatpush1.msra.mxu0 0.0
        %306 = vmatprep.subr.mxu0 0.0
        %307 = vmatpush1.msra.mxu0 0.0
        %308 = vmatprep.subr.mxu0 0.0
        %309 = vmatpush1.msra.mxu0 0.0
        %310 = vmatprep.subr.mxu0 0.0
        %311 = vmatpush1.msra.mxu0 0.0
        %312 = vmatprep.subr.mxu0 0.0
        %313 = vmatpush1.msra.mxu0 0.0
        %314 = vmatprep.mubr.f32.mxu0 0.0
        %315 = vmatmul.mubr.f32.gmra.mrb[0].mxu0 %v246
        %v316 = vpop.f32.mrb[0].mxu0
        %v317 = vadd.f32 0.0, %v316
        %v318 = vpop.f32.mrb[0].mxu0
        %319 = vmatprep.mubr.f32.mxu0 0.0
        %320 = vmatmul.mubr.f32.gmra.mrb[0].mxu0 %v248
        %v321 = vpop.f32.mrb[0].mxu0
        %v322 = vadd.f32 0.0, %v321
        %v323 = vpop.f32.mrb[0].mxu0
        %324 = vdwg.mxu0
        %v325 = vsel %vm245, %v211, 0
        %v327 = vsel %vm245, %v212, 0
        %329 = vmatprep.subr.mxu0 0.0
        %330 = vmatpush1.msra.mxu0 %v217
        %331 = vmatprep.subr.mxu0 0.0
        %332 = vmatpush1.msra.mxu0 %v218
        %333 = vmatprep.subr.mxu0 0.0
        %334 = vmatpush1.msra.mxu0 %v219
        %335 = vmatprep.subr.mxu0 0.0
        %336 = vmatpush1.msra.mxu0 %v220
        %337 = vmatprep.subr.mxu0 0.0
        %338 = vmatpush1.msra.mxu0 %v221
        %339 = vmatprep.subr.mxu0 0.0
        %340 = vmatpush1.msra.mxu0 %v222
        %341 = vmatprep.subr.mxu0 0.0
        %342 = vmatpush1.msra.mxu0 %v223
        %343 = vmatprep.subr.mxu0 0.0
        %344 = vmatpush1.msra.mxu0 %v224
        %345 = vmatprep.subr.mxu0 0.0
        %346 = vmatpush1.msra.mxu0 %v225
        %347 = vmatprep.subr.mxu0 0.0
        %348 = vmatpush1.msra.mxu0 0.0
        %349 = vmatprep.subr.mxu0 0.0
        %350 = vmatpush1.msra.mxu0 0.0
        %351 = vmatprep.subr.mxu0 0.0
        %352 = vmatpush1.msra.mxu0 0.0
        %353 = vmatprep.subr.mxu0 0.0
        %354 = vmatpush1.msra.mxu0 0.0
        %355 = vmatprep.subr.mxu0 0.0
        %356 = vmatpush1.msra.mxu0 0.0
        %357 = vmatprep.subr.mxu0 0.0
        %358 = vmatpush1.msra.mxu0 0.0
        %359 = vmatprep.subr.mxu0 0.0
        %360 = vmatpush1.msra.mxu0 0.0
        %361 = vmatprep.subr.mxu0 0.0
        %362 = vmatpush1.msra.mxu0 0.0
        %363 = vmatprep.subr.mxu0 0.0
        %364 = vmatpush1.msra.mxu0 0.0
        %365 = vmatprep.subr.mxu0 0.0
        %366 = vmatpush1.msra.mxu0 0.0
        %367 = vmatprep.subr.mxu0 0.0
        %368 = vmatpush1.msra.mxu0 0.0
        %369 = vmatprep.subr.mxu0 0.0
        %370 = vmatpush1.msra.mxu0 0.0
        %371 = vmatprep.subr.mxu0 0.0
        %372 = vmatpush1.msra.mxu0 0.0
        %373 = vmatprep.subr.mxu0 0.0
        %374 = vmatpush1.msra.mxu0 0.0
        %375 = vmatprep.subr.mxu0 0.0
        %376 = vmatpush1.msra.mxu0 0.0
        %377 = vmatprep.subr.mxu0 0.0
        %378 = vmatpush1.msra.mxu0 0.0
        %379 = vmatprep.subr.mxu0 0.0
        %380 = vmatpush1.msra.mxu0 0.0
        %381 = vmatprep.subr.mxu0 0.0
        %382 = vmatpush1.msra.mxu0 0.0
        %383 = vmatprep.subr.mxu0 0.0
        %384 = vmatpush1.msra.mxu0 0.0
        %385 = vmatprep.subr.mxu0 0.0
        %386 = vmatpush1.msra.mxu0 0.0
        %387 = vmatprep.subr.mxu0 0.0
        %388 = vmatpush1.msra.mxu0 0.0
        %389 = vmatprep.subr.mxu0 0.0
        %390 = vmatpush1.msra.mxu0 0.0
        %391 = vmatprep.subr.mxu0 0.0
        %392 = vmatpush1.msra.mxu0 0.0
        %393 = vmatprep.mubr.f32.mxu0 0.0
        %394 = vmatmul.mubr.f32.gmra.mrb[0].mxu0 %v325
        %v395 = vpop.f32.mrb[0].mxu0
        %v396 = vadd.f32 %v317, %v395
        %v397 = vpop.f32.mrb[0].mxu0
        %398 = vmatprep.mubr.f32.mxu0 0.0
        %399 = vmatmul.mubr.f32.gmra.mrb[0].mxu0 %v327
        %v400 = vpop.f32.mrb[0].mxu0
        %v401 = vadd.f32 %v322, %v400
        %v402 = vpop.f32.mrb[0].mxu0
        %403 = vdwg.mxu0
        %v407 = vrot.slane %v214, 1
        %v408 = vrot.slane %v215, 1
        %v409 = vsel %vm239, %v407, %v408
        %v410 = vrot.slane %v216, 1
        %v411 = vsel %vm239, %v408, %v410
        %v414 = vadd.f32 %v214, %v409
        %v415 = vadd.f32 %v215, %v411
        %s416 = scalar_lea.vmem [#allocation2], 144
        %v417 = vld [vmem:[%s416] sm:$0xff]
        %v418 = vld [vmem:[%s416 + $0x8] sm:$0xff]
        %v419 = vld [vmem:[%s416 + $0x10] sm:$0xff]
        %v420 = vld [vmem:[%s416 + $0x18] sm:$0xff]
        %v421 = vld [vmem:[%s416 + $0x20] sm:$0xff]
        %v422 = vld [vmem:[%s416 + $0x28] sm:$0xff]
        %v423 = vld [vmem:[%s416 + $0x30] sm:$0xff]
        %v424 = vld [vmem:[%s416 + $0x38] sm:$0xff]
        %v425 = vld [vmem:[%s416 + $0x40] sm:$0xff]
        %vm426 = vcmask 1045504
        %v427 = vrot.slane %v211, 2
        %v428 = vrot.slane %v212, 2
        %v429 = vsel %vm426, %v427, %v428
        %v430 = vrot.slane %v213, 2
        %v431 = vsel %vm426, %v428, %v430
        %v432 = vsel %vm245, %v429, 0
        %v434 = vsel %vm245, %v431, 0
        %436 = vmatprep.subr.mxu0 0.0
        %437 = vmatpush1.msra.mxu0 %v417
        %438 = vmatprep.subr.mxu0 0.0
        %439 = vmatpush1.msra.mxu0 %v418
        %440 = vmatprep.subr.mxu0 0.0
        %441 = vmatpush1.msra.mxu0 %v419
        %442 = vmatprep.subr.mxu0 0.0
        %443 = vmatpush1.msra.mxu0 %v420
        %444 = vmatprep.subr.mxu0 0.0
        %445 = vmatpush1.msra.mxu0 %v421
        %446 = vmatprep.subr.mxu0 0.0
        %447 = vmatpush1.msra.mxu0 %v422
        %448 = vmatprep.subr.mxu0 0.0
        %449 = vmatpush1.msra.mxu0 %v423
        %450 = vmatprep.subr.mxu0 0.0
        %451 = vmatpush1.msra.mxu0 %v424
        %452 = vmatprep.subr.mxu0 0.0
        %453 = vmatpush1.msra.mxu0 %v425
        %454 = vmatprep.subr.mxu0 0.0
        %455 = vmatpush1.msra.mxu0 0.0
        %456 = vmatprep.subr.mxu0 0.0
        %457 = vmatpush1.msra.mxu0 0.0
        %458 = vmatprep.subr.mxu0 0.0
        %459 = vmatpush1.msra.mxu0 0.0
        %460 = vmatprep.subr.mxu0 0.0
        %461 = vmatpush1.msra.mxu0 0.0
        %462 = vmatprep.subr.mxu0 0.0
        %463 = vmatpush1.msra.mxu0 0.0
        %464 = vmatprep.subr.mxu0 0.0
        %465 = vmatpush1.msra.mxu0 0.0
        %466 = vmatprep.subr.mxu0 0.0
        %467 = vmatpush1.msra.mxu0 0.0
        %468 = vmatprep.subr.mxu0 0.0
        %469 = vmatpush1.msra.mxu0 0.0
        %470 = vmatprep.subr.mxu0 0.0
        %471 = vmatpush1.msra.mxu0 0.0
        %472 = vmatprep.subr.mxu0 0.0
        %473 = vmatpush1.msra.mxu0 0.0
        %474 = vmatprep.subr.mxu0 0.0
        %475 = vmatpush1.msra.mxu0 0.0
        %476 = vmatprep.subr.mxu0 0.0
        %477 = vmatpush1.msra.mxu0 0.0
        %478 = vmatprep.subr.mxu0 0.0
        %479 = vmatpush1.msra.mxu0 0.0
        %480 = vmatprep.subr.mxu0 0.0
        %481 = vmatpush1.msra.mxu0 0.0
        %482 = vmatprep.subr.mxu0 0.0
        %483 = vmatpush1.msra.mxu0 0.0
        %484 = vmatprep.subr.mxu0 0.0
        %485 = vmatpush1.msra.mxu0 0.0
        %486 = vmatprep.subr.mxu0 0.0
        %487 = vmatpush1.msra.mxu0 0.0
        %488 = vmatprep.subr.mxu0 0.0
        %489 = vmatpush1.msra.mxu0 0.0
        %490 = vmatprep.subr.mxu0 0.0
        %491 = vmatpush1.msra.mxu0 0.0
        %492 = vmatprep.subr.mxu0 0.0
        %493 = vmatpush1.msra.mxu0 0.0
        %494 = vmatprep.subr.mxu0 0.0
        %495 = vmatpush1.msra.mxu0 0.0
        %496 = vmatprep.subr.mxu0 0.0
        %497 = vmatpush1.msra.mxu0 0.0
        %498 = vmatprep.subr.mxu0 0.0
        %499 = vmatpush1.msra.mxu0 0.0
        %500 = vmatprep.mubr.f32.mxu0 0.0
        %501 = vmatmul.mubr.f32.gmra.mrb[0].mxu0 %v432
        %v502 = vpop.f32.mrb[0].mxu0
        %v503 = vadd.f32 0.0, %v502
        %v504 = vpop.f32.mrb[0].mxu0
        %505 = vmatprep.mubr.f32.mxu0 0.0
        %506 = vmatmul.mubr.f32.gmra.mrb[0].mxu0 %v434
        %v507 = vpop.f32.mrb[0].mxu0
        %v508 = vadd.f32 0.0, %v507
        %v509 = vpop.f32.mrb[0].mxu0
        %510 = vdwg.mxu0
        %v511 = vadd.f32 %v396, %v503
        %v512 = vadd.f32 %v401, %v508
        %v513 = vrot.slane %v214, 2
        %v514 = vrot.slane %v215, 2
        %v515 = vsel %vm426, %v513, %v514
        %v516 = vrot.slane %v216, 2
        %v517 = vsel %vm426, %v514, %v516
        %v520 = vadd.f32 %v414, %v515
        %v521 = vadd.f32 %v415, %v517
        %v522 = vld [vmem:[%s2] sm:$0xff]
        %v523 = vld [vmem:[%s2 + $0x8] sm:$0xff]
        %v524 = vld [vmem:[%s2 + $0x10] sm:$0xff]
        %v525 = vld [vmem:[%s2 + $0x18] sm:$0xff]
        %v526 = vld [vmem:[%s2 + $0x20] sm:$0xff]
        %v527 = vld [vmem:[%s2 + $0x28] sm:$0xff]
        %v528 = vld [vmem:[%s2 + $0x30] sm:$0xff]
        %v529 = vld [vmem:[%s2 + $0x38] sm:$0xff]
        %v530 = vld [vmem:[%s2 + $0x40] sm:$0xff]
        %v532 = vsel %vm245, %v520, 0
        %v535 = vsel %vm245, %v521, 0
        %537 = vmatprep.subr.mxu0 0.0
        %538 = vmatpush1.msra.mxu0 %v522
        %539 = vmatprep.subr.mxu0 0.0
        %540 = vmatpush1.msra.mxu0 %v523
        %541 = vmatprep.subr.mxu0 0.0
        %542 = vmatpush1.msra.mxu0 %v524
        %543 = vmatprep.subr.mxu0 0.0
        %544 = vmatpush1.msra.mxu0 %v525
        %545 = vmatprep.subr.mxu0 0.0
        %546 = vmatpush1.msra.mxu0 %v526
        %547 = vmatprep.subr.mxu0 0.0
        %548 = vmatpush1.msra.mxu0 %v527
        %549 = vmatprep.subr.mxu0 0.0
        %550 = vmatpush1.msra.mxu0 %v528
        %551 = vmatprep.subr.mxu0 0.0
        %552 = vmatpush1.msra.mxu0 %v529
        %553 = vmatprep.subr.mxu0 0.0
        %554 = vmatpush1.msra.mxu0 %v530
        %555 = vmatprep.subr.mxu0 0.0
        %556 = vmatpush1.msra.mxu0 0.0
        %557 = vmatprep.subr.mxu0 0.0
        %558 = vmatpush1.msra.mxu0 0.0
        %559 = vmatprep.subr.mxu0 0.0
        %560 = vmatpush1.msra.mxu0 0.0
        %561 = vmatprep.subr.mxu0 0.0
        %562 = vmatpush1.msra.mxu0 0.0
        %563 = vmatprep.subr.mxu0 0.0
        %564 = vmatpush1.msra.mxu0 0.0
        %565 = vmatprep.subr.mxu0 0.0
        %566 = vmatpush1.msra.mxu0 0.0
        %567 = vmatprep.subr.mxu0 0.0
        %568 = vmatpush1.msra.mxu0 0.0
        %569 = vmatprep.subr.mxu0 0.0
        %570 = vmatpush1.msra.mxu0 0.0
        %571 = vmatprep.subr.mxu0 0.0
        %572 = vmatpush1.msra.mxu0 0.0
        %573 = vmatprep.subr.mxu0 0.0
        %574 = vmatpush1.msra.mxu0 0.0
        %575 = vmatprep.subr.mxu0 0.0
        %576 = vmatpush1.msra.mxu0 0.0
        %577 = vmatprep.subr.mxu0 0.0
        %578 = vmatpush1.msra.mxu0 0.0
        %579 = vmatprep.subr.mxu0 0.0
        %580 = vmatpush1.msra.mxu0 0.0
        %581 = vmatprep.subr.mxu0 0.0
        %582 = vmatpush1.msra.mxu0 0.0
        %583 = vmatprep.subr.mxu0 0.0
        %584 = vmatpush1.msra.mxu0 0.0
        %585 = vmatprep.subr.mxu0 0.0
        %586 = vmatpush1.msra.mxu0 0.0
        %587 = vmatprep.subr.mxu0 0.0
        %588 = vmatpush1.msra.mxu0 0.0
        %589 = vmatprep.subr.mxu0 0.0
        %590 = vmatpush1.msra.mxu0 0.0
        %591 = vmatprep.subr.mxu0 0.0
        %592 = vmatpush1.msra.mxu0 0.0
        %593 = vmatprep.subr.mxu0 0.0
        %594 = vmatpush1.msra.mxu0 0.0
        %595 = vmatprep.subr.mxu0 0.0
        %596 = vmatpush1.msra.mxu0 0.0
        %597 = vmatprep.subr.mxu0 0.0
        %598 = vmatpush1.msra.mxu0 0.0
        %599 = vmatprep.subr.mxu0 0.0
        %600 = vmatpush1.msra.mxu0 0.0
        %601 = vmatprep.mubr.f32.mxu0 0.0
        %602 = vmatmul.mubr.f32.gmra.mrb[0].mxu0 %v532
        %v603 = vpop.f32.mrb[0].mxu0
        %v604 = vadd.f32 0.0, %v603
        %v605 = vpop.f32.mrb[0].mxu0
        %606 = vmatprep.mubr.f32.mxu0 0.0
        %607 = vmatmul.mubr.f32.gmra.mrb[0].mxu0 %v535
        %v608 = vpop.f32.mrb[0].mxu0
        %v609 = vadd.f32 0.0, %v608
        %v610 = vpop.f32.mrb[0].mxu0
        %611 = vdwg.mxu0
        %v612 = vadd.f32 %v511, %v604
        %v613 = vadd.f32 %v512, %v609
        %v614 = vld [vmem:[%s3] sm:$0x1]
        %v616 = vlaneseq
        %v617 = vshrl.u32 %v616, 7
        %v618 = vsub.s32 0, %v617
        %v619 = vrot.slane %v614, %v618
        %v621 = vadd.f32 %v612, %v619
        %v622 = vadd.f32 %v613, %v619
        %v623 = vmul.f32 %v621, -0.0625
        %v624 = vmul.f32 %v622, -0.0625
        %v625 = vmul.f32 %v623, 1.442695
        %v626 = vpow.pop %v625
        %v627 = vmul.f32 %v624, 1.442695
        %v628 = vpow.pop %v627
        %629 = vst [vmem:[%s205] sm:$0xff] %v626
        %630 = vst [vmem:[%s205 + $0x8] sm:$0xff] %v628
        %s631 = sand.u32 %s116, 1
        %s632 = scalar_lea.sflag [#allocation4], %s631
        %s633 = sand.u32 %s116, 1
        %s634 = smul.addr %s633, 16
        %s635 = scalar_lea.vmem [#allocation5], %s634
        // Predicated region
        $region41: #{tpu_custom_call.1} parent=35 // pred_check
          %p636 = pneg %p126
        $region42: #{tpu_custom_call.1} parent=35 // pred_check_branch
          %638 = sbr.rel (%p636) target = $region44
        $region43: #{tpu_custom_call.1} parent=35 // pred_region
          %s640 = ssub.s32 256, 256
          %641 = vsyncadd %s632, %s640
          %s642 = smul.addr %s19, 2
          %s643 = smul.addr %s642, 128
          %s644 = scalar_lea.hbm %s4, %s643
          %s645 = sshll.u32 %s635, 4
          %s646 = int_to_ptr.vmem [resolvable:$true] %s645
          %651 = dma.vmem_to_hbm [thread:$0]  %s646, 256, %s644, %s632, 128, 128, 8
        $region44: #{tpu_custom_call.1} parent=35 // pred_fallthru
          _
      $region36: #{tpu_custom_call.1} parent=5 // pred_fallthru
        _
      %p652 = scmp.le.s32.totalorder 2, %s14
      // Predicated region
      $region45: #{tpu_custom_call.1} parent=5 // pred_check
        %p653 = pneg %p652
      $region46: #{tpu_custom_call.1} parent=5 // pred_check_branch
        %655 = sbr.rel (%p653) target = $region48
      $region47: #{tpu_custom_call.1} parent=5 // pred_region
        %s656 = ssub.s32 %s14, 2
        // Predicated region
        $region49: #{tpu_custom_call.1} parent=47 // pred_check
          %p657 = pneg %p132
        $region50: #{tpu_custom_call.1} parent=47 // pred_check_branch
          %659 = sbr.rel (%p657) target = $region52
        $region51: #{tpu_custom_call.1} parent=47 // pred_region
          %s660 = sand.u32 %s117, 1
          %s661 = scalar_lea.sflag [#allocation4], %s660
          %s662 = sand.u32 %s117, 1
          %s663 = smul.addr %s662, 16
          %s664 = scalar_lea.vmem [#allocation5], %s663
          %665 = dma.done %s661, 256
        $region52: #{tpu_custom_call.1} parent=47 // pred_fallthru
          _
      $region48: #{tpu_custom_call.1} parent=5 // pred_fallthru
        _
    $region6: #{tpu_custom_call.1} parent=1 // loop_footer
      %s18 = sadd.s32 1, %s14
    $region7: #{tpu_custom_call.1} parent=1 // loop_footer_branch
      %13 = sbr.rel target = $region3
    $region8: #{tpu_custom_call.1} parent=1 // loop_exit
      _
    %666 = vsyncpa [#allocation3], 1
    %s667 = scalar_lea.sflag [#allocation3], 1
    %668 = vsyncpa %s667, 1
    %669 = vsyncpa [#allocation4], 1
    %s670 = scalar_lea.sflag [#allocation4], 1
    %671 = vsyncpa %s670, 1

</llo_original>
